<compile_context>
chip_gen: v6e
topology: v6e:2x2x1
jax: 0.10.0
libtpu: 0.0.40
codegen_flags: <defaults>
</compile_context>

<pallas_src>
import functools

import jax
import jax.numpy as jnp
from jax.experimental import pallas as pl
from jax.experimental.pallas import tpu as pltpu

K_IN = 28 * 28          # 784
K_PAD = 896             # 7 * 128, padded contraction dim for layer 1
OUT_PAD = 128           # lane-dense padded output width (real outputs = 10)
NEG_BIG = -1e30         # pad-column bias so exp() underflows to 0 in log-softmax


def _round_up(x, m):
    return ((x + m - 1) // m) * m


def dnn_kernel(x_ref,
               w1_ref, b1_ref,
               w2_ref, b2_ref,
               w3_ref, b3_ref,
               w4_ref, b4_ref,
               o_ref):
    # x_ref: (TB, 896) bf16 tile; weights bf16, biases f32; all four layers fused.
    x = x_ref[...]

    h = jnp.dot(x, w1_ref[...], preferred_element_type=jnp.float32) + b1_ref[...]
    h = jnp.maximum(h, 0.0).astype(jnp.bfloat16)

    h = jnp.dot(h, w2_ref[...], preferred_element_type=jnp.float32) + b2_ref[...]
    h = jnp.maximum(h, 0.0).astype(jnp.bfloat16)

    h = jnp.dot(h, w3_ref[...], preferred_element_type=jnp.float32) + b3_ref[...]
    h = jnp.maximum(h, 0.0).astype(jnp.bfloat16)

    # (TB, 128) f32 logits; pad columns carry -1e30 bias -> exp() == 0 below.
    logits = jnp.dot(h, w4_ref[...], preferred_element_type=jnp.float32) + b4_ref[...]

    # Numerically stable LogSoftmax along the feature axis (f32 epilogue).
    m = jnp.max(logits, axis=-1, keepdims=True)
    lse = jnp.log(jnp.sum(jnp.exp(logits - m), axis=-1, keepdims=True)) + m
    o_ref[...] = (logits - lse).astype(o_ref.dtype)


@functools.partial(jax.jit, static_argnames=("tile_b",))
def dnn_forward(x, params, *, tile_b=256):
    """x: (B, 1, 28, 28) or (B, 784). Returns (B, 10) log-probabilities (f32)."""
    B = x.shape[0]
    x2d = x.reshape(B, -1).astype(jnp.float32)
    (w1, b1), (w2, b2), (w3, b3), (w4, b4) = params

    # ---- batch tiling: TB rows per grid step (multiple of 8 sublanes) ----
    if B <= tile_b:
        TB = max(8, _round_up(B, 8))
        Bp = TB
    else:
        TB = tile_b
        Bp = _round_up(B, TB)

    # ---- pad / cast operands ----
    # x: pad batch to Bp, features 784 -> 896, cast to bf16 (streamed operand).
    xp = jnp.zeros((Bp, K_PAD), jnp.bfloat16)
    xp = xp.at[:B, :K_IN].set(x2d.astype(jnp.bfloat16))

    # W1: pad contraction rows 784 -> 896 with zeros.
    w1p = jnp.zeros((K_PAD, 64), jnp.bfloat16).at[:K_IN, :].set(w1.astype(jnp.bfloat16))
    w2b = w2.astype(jnp.bfloat16)
    w3b = w3.astype(jnp.bfloat16)
    # W4 / b4: pad outputs 10 -> 128 (lane-dense store). Pad bias = -1e30.
    w4p = jnp.zeros((64, OUT_PAD), jnp.bfloat16).at[:, :10].set(w4.astype(jnp.bfloat16))
    b4p = jnp.full((1, OUT_PAD), NEG_BIG, jnp.float32).at[:, :10].set(
        b4.reshape(1, -1).astype(jnp.float32))

    b1f = b1.reshape(1, -1).astype(jnp.float32)
    b2f = b2.reshape(1, -1).astype(jnp.float32)
    b3f = b3.reshape(1, -1).astype(jnp.float32)

    num_tiles = Bp // TB

    tiled = lambda shape: pl.BlockSpec(shape, lambda i: (i, 0))      # per-batch-tile
    resident = lambda shape: pl.BlockSpec(shape, lambda i: (0, 0))   # stays in VMEM

    flops = 2 * Bp * (K_PAD * 64 + 64 * 64 + 64 * 64 + 64 * OUT_PAD)
    bytes_accessed = (Bp * K_PAD * 2 + Bp * OUT_PAD * 4 +
                      (K_PAD * 64 + 64 * 64 * 2 + 64 * OUT_PAD) * 2 +
                      (64 * 3 + OUT_PAD) * 4)

    out_padded = pl.pallas_call(
        dnn_kernel,
        out_shape=jax.ShapeDtypeStruct((Bp, OUT_PAD), jnp.float32),
        grid=(num_tiles,),
        in_specs=[
            tiled((TB, K_PAD)),            # x tile (streamed / pipelined)
            resident((K_PAD, 64)), resident((1, 64)),
            resident((64, 64)),    resident((1, 64)),
            resident((64, 64)),    resident((1, 64)),
            resident((64, OUT_PAD)), resident((1, OUT_PAD)),
        ],
        out_specs=tiled((TB, OUT_PAD)),
        compiler_params=pltpu.CompilerParams(
            dimension_semantics=("parallel",)),
        cost_estimate=pl.CostEstimate(
            flops=flops,
            transcendentals=Bp * OUT_PAD,
            bytes_accessed=bytes_accessed),
    )(xp, w1p, b1f, w2b, b2f, w3b, b3f, w4p, b4p)

    return out_padded[:B, :10]


def init_params(key):
    """Deterministic init matching nn.Linear shapes (stored transposed: (in, out))."""
    dims = [(K_IN, 64), (64, 64), (64, 64), (64, 10)]
    params = []
    for i, (fin, fout) in enumerate(dims):
        kw, kb = jax.random.split(jax.random.fold_in(key, i))
        bound = 1.0 / jnp.sqrt(fin)
        w = jax.random.uniform(kw, (fin, fout), jnp.float32, -bound, bound)
        b = jax.random.uniform(kb, (1, fout), jnp.float32, -bound, bound)
        params.append((w, b))
    return params


def dnn_reference(x, params):
    """Pure-JAX f32 reference matching the PyTorch module."""
    B = x.shape[0]
    h = x.reshape(B, -1).astype(jnp.float32)
    for i, (w, b) in enumerate(params):
        h = h @ w + b
        if i < 3:
            h = jnp.maximum(h, 0.0)
    return jax.nn.log_softmax(h, axis=1)


if __name__ == "__main__":
    key = jax.random.PRNGKey(0)
    kx, kp = jax.random.split(key)
    params = init_params(kp)

    B = 8
    x = jax.random.normal(kx, (B, 1, 28, 28), dtype=jnp.float32)

    out = dnn_forward(x, params)
    out = jax.block_until_ready(out)

    ref = dnn_reference(x, params)
    assert out.shape == (B, 10)
    # bf16 matmul inputs with f32 accumulation -> small numerical drift vs f32 reference.
    assert jnp.allclose(out, ref, atol=3e-2, rtol=3e-2), "mismatch vs reference"
    assert jnp.all(jnp.isfinite(out))
    print("KERNEL_OK")
</pallas_src>

<mosaic_0001>
module attributes {stable_mosaic.version = 11 : i64} {
  func.func @dnn_kernel(%arg0: i32, %arg1: memref<8x896xbf16, #tpu.memory_space<vmem>>, %arg2: memref<896x64xbf16, #tpu.memory_space<vmem>>, %arg3: memref<1x64xf32, #tpu.memory_space<vmem>>, %arg4: memref<64x64xbf16, #tpu.memory_space<vmem>>, %arg5: memref<1x64xf32, #tpu.memory_space<vmem>>, %arg6: memref<64x64xbf16, #tpu.memory_space<vmem>>, %arg7: memref<1x64xf32, #tpu.memory_space<vmem>>, %arg8: memref<64x128xbf16, #tpu.memory_space<vmem>>, %arg9: memref<1x128xf32, #tpu.memory_space<vmem>>, %arg10: memref<8x128xf32, #tpu.memory_space<vmem>>) attributes {dimension_semantics = [#tpu.dimension_semantics<parallel>], iteration_bounds = array<i64: 1>, scalar_prefetch = 0 : i64, scratch_operands = 0 : i64, tpu.core_type = #tpu.core_type<tc>, window_params = [{transform_indices = @transform_0, window_bounds = array<i64: 8, 896>}, {pipeline_mode = #tpu.pipeline_mode<synchronous>, transform_indices = @transform_1, window_bounds = array<i64: 896, 64>}, {pipeline_mode = #tpu.pipeline_mode<synchronous>, transform_indices = @transform_2, window_bounds = array<i64: 1, 64>}, {pipeline_mode = #tpu.pipeline_mode<synchronous>, transform_indices = @transform_3, window_bounds = array<i64: 64, 64>}, {pipeline_mode = #tpu.pipeline_mode<synchronous>, transform_indices = @transform_4, window_bounds = array<i64: 1, 64>}, {pipeline_mode = #tpu.pipeline_mode<synchronous>, transform_indices = @transform_5, window_bounds = array<i64: 64, 64>}, {pipeline_mode = #tpu.pipeline_mode<synchronous>, transform_indices = @transform_6, window_bounds = array<i64: 1, 64>}, {pipeline_mode = #tpu.pipeline_mode<synchronous>, transform_indices = @transform_7, window_bounds = array<i64: 64, 128>}, {pipeline_mode = #tpu.pipeline_mode<synchronous>, transform_indices = @transform_8, window_bounds = array<i64: 1, 128>}, {transform_indices = @transform_9, window_bounds = array<i64: 8, 128>}]} {
    %c0 = arith.constant 0 : index
    %c0_0 = arith.constant 0 : index
    %0 = vector.load %arg1[%c0, %c0_0] : memref<8x896xbf16, #tpu.memory_space<vmem>>, vector<8x896xbf16>
    %c0_1 = arith.constant 0 : index
    %c0_2 = arith.constant 0 : index
    %1 = vector.load %arg2[%c0_1, %c0_2] : memref<896x64xbf16, #tpu.memory_space<vmem>>, vector<896x64xbf16>
    %cst = arith.constant dense<0.000000e+00> : vector<8x64xf32>
    %2 = tpu.matmul %0, %1, %cst {dimension_numbers = #tpu.dot_dimension_numbers<[1], [0], [0], [1], [0, 0, 1, 1], [], []>} : vector<8x896xbf16>, vector<896x64xbf16>, vector<8x64xf32> -> vector<8x64xf32>
    %c0_3 = arith.constant 0 : index
    %c0_4 = arith.constant 0 : index
    %3 = vector.load %arg3[%c0_3, %c0_4] : memref<1x64xf32, #tpu.memory_space<vmem>>, vector<1x64xf32>
    %4 = vector.broadcast %3 : vector<1x64xf32> to vector<8x64xf32>
    %5 = arith.addf %2, %4 : vector<8x64xf32>
    %cst_5 = arith.constant 0.000000e+00 : f32
    %6 = vector.broadcast %cst_5 : f32 to vector<8x64xf32>
    %7 = arith.maximumf %5, %6 : vector<8x64xf32>
    %8 = arith.truncf %7 : vector<8x64xf32> to vector<8x64xbf16>
    %c0_6 = arith.constant 0 : index
    %c0_7 = arith.constant 0 : index
    %9 = vector.load %arg4[%c0_6, %c0_7] : memref<64x64xbf16, #tpu.memory_space<vmem>>, vector<64x64xbf16>
    %cst_8 = arith.constant dense<0.000000e+00> : vector<8x64xf32>
    %10 = tpu.matmul %8, %9, %cst_8 {dimension_numbers = #tpu.dot_dimension_numbers<[1], [0], [0], [1], [0, 0, 1, 1], [], []>} : vector<8x64xbf16>, vector<64x64xbf16>, vector<8x64xf32> -> vector<8x64xf32>
    %c0_9 = arith.constant 0 : index
    %c0_10 = arith.constant 0 : index
    %11 = vector.load %arg5[%c0_9, %c0_10] : memref<1x64xf32, #tpu.memory_space<vmem>>, vector<1x64xf32>
    %12 = vector.broadcast %11 : vector<1x64xf32> to vector<8x64xf32>
    %13 = arith.addf %10, %12 : vector<8x64xf32>
    %cst_11 = arith.constant 0.000000e+00 : f32
    %14 = vector.broadcast %cst_11 : f32 to vector<8x64xf32>
    %15 = arith.maximumf %13, %14 : vector<8x64xf32>
    %16 = arith.truncf %15 : vector<8x64xf32> to vector<8x64xbf16>
    %c0_12 = arith.constant 0 : index
    %c0_13 = arith.constant 0 : index
    %17 = vector.load %arg6[%c0_12, %c0_13] : memref<64x64xbf16, #tpu.memory_space<vmem>>, vector<64x64xbf16>
    %cst_14 = arith.constant dense<0.000000e+00> : vector<8x64xf32>
    %18 = tpu.matmul %16, %17, %cst_14 {dimension_numbers = #tpu.dot_dimension_numbers<[1], [0], [0], [1], [0, 0, 1, 1], [], []>} : vector<8x64xbf16>, vector<64x64xbf16>, vector<8x64xf32> -> vector<8x64xf32>
    %c0_15 = arith.constant 0 : index
    %c0_16 = arith.constant 0 : index
    %19 = vector.load %arg7[%c0_15, %c0_16] : memref<1x64xf32, #tpu.memory_space<vmem>>, vector<1x64xf32>
    %20 = vector.broadcast %19 : vector<1x64xf32> to vector<8x64xf32>
    %21 = arith.addf %18, %20 : vector<8x64xf32>
    %cst_17 = arith.constant 0.000000e+00 : f32
    %22 = vector.broadcast %cst_17 : f32 to vector<8x64xf32>
    %23 = arith.maximumf %21, %22 : vector<8x64xf32>
    %24 = arith.truncf %23 : vector<8x64xf32> to vector<8x64xbf16>
    %c0_18 = arith.constant 0 : index
    %c0_19 = arith.constant 0 : index
    %25 = vector.load %arg8[%c0_18, %c0_19] : memref<64x128xbf16, #tpu.memory_space<vmem>>, vector<64x128xbf16>
    %cst_20 = arith.constant dense<0.000000e+00> : vector<8x128xf32>
    %26 = tpu.matmul %24, %25, %cst_20 {dimension_numbers = #tpu.dot_dimension_numbers<[1], [0], [0], [1], [0, 0, 1, 1], [], []>} : vector<8x64xbf16>, vector<64x128xbf16>, vector<8x128xf32> -> vector<8x128xf32>
    %c0_21 = arith.constant 0 : index
    %c0_22 = arith.constant 0 : index
    %27 = vector.load %arg9[%c0_21, %c0_22] : memref<1x128xf32, #tpu.memory_space<vmem>>, vector<1x128xf32>
    %28 = vector.broadcast %27 : vector<1x128xf32> to vector<8x128xf32>
    %29 = arith.addf %26, %28 : vector<8x128xf32>
    %cst_23 = arith.constant dense<0xFF800000> : vector<8xf32>
    %30 = vector.multi_reduction <maximumf>, %29, %cst_23 [1] : vector<8x128xf32> to vector<8xf32>
    %31 = vector.shape_cast %30 : vector<8xf32> to vector<8x1xf32>
    %32 = vector.broadcast %31 : vector<8x1xf32> to vector<8x128xf32>
    %33 = arith.subf %29, %32 : vector<8x128xf32>
    %34 = math.exp %33 : vector<8x128xf32>
    %cst_24 = arith.constant dense<0.000000e+00> : vector<8xf32>
    %35 = vector.multi_reduction <add>, %34, %cst_24 [1] : vector<8x128xf32> to vector<8xf32>
    %36 = vector.shape_cast %35 : vector<8xf32> to vector<8x1xf32>
    %37 = math.log %36 : vector<8x1xf32>
    %38 = arith.addf %37, %31 : vector<8x1xf32>
    %39 = vector.broadcast %38 : vector<8x1xf32> to vector<8x128xf32>
    %40 = arith.subf %29, %39 : vector<8x128xf32>
    %c0_25 = arith.constant 0 : index
    %c0_26 = arith.constant 0 : index
    %41 = vector.load %arg10[%c0_25, %c0_26] : memref<8x128xf32, #tpu.memory_space<vmem>>, vector<8x128xf32>
    tpu.vector_store %arg10[%c0_25, %c0_26], %40 {strides = array<i32>} : memref<8x128xf32, #tpu.memory_space<vmem>>, vector<8x128xf32>,
    return
  }
  func.func @transform_0(%arg0: i32) -> (i32, i32) {
    %c0_i32 = arith.constant 0 : i32
    %c0_i32_0 = arith.constant 0 : i32
    return %arg0, %c0_i32 : i32, i32
  }
  func.func @transform_1(%arg0: i32) -> (i32, i32) {
    %c0_i32 = arith.constant 0 : i32
    %c0_i32_0 = arith.constant 0 : i32
    %c0_i32_1 = arith.constant 0 : i32
    return %c0_i32, %c0_i32_0 : i32, i32
  }
  func.func @transform_2(%arg0: i32) -> (i32, i32) {
    %c0_i32 = arith.constant 0 : i32
    %c0_i32_0 = arith.constant 0 : i32
    %c0_i32_1 = arith.constant 0 : i32
    return %c0_i32, %c0_i32_0 : i32, i32
  }
  func.func @transform_3(%arg0: i32) -> (i32, i32) {
    %c0_i32 = arith.constant 0 : i32
    %c0_i32_0 = arith.constant 0 : i32
    %c0_i32_1 = arith.constant 0 : i32
    return %c0_i32, %c0_i32_0 : i32, i32
  }
  func.func @transform_4(%arg0: i32) -> (i32, i32) {
    %c0_i32 = arith.constant 0 : i32
    %c0_i32_0 = arith.constant 0 : i32
    %c0_i32_1 = arith.constant 0 : i32
    return %c0_i32, %c0_i32_0 : i32, i32
  }
  func.func @transform_5(%arg0: i32) -> (i32, i32) {
    %c0_i32 = arith.constant 0 : i32
    %c0_i32_0 = arith.constant 0 : i32
    %c0_i32_1 = arith.constant 0 : i32
    return %c0_i32, %c0_i32_0 : i32, i32
  }
  func.func @transform_6(%arg0: i32) -> (i32, i32) {
    %c0_i32 = arith.constant 0 : i32
    %c0_i32_0 = arith.constant 0 : i32
    %c0_i32_1 = arith.constant 0 : i32
    return %c0_i32, %c0_i32_0 : i32, i32
  }
  func.func @transform_7(%arg0: i32) -> (i32, i32) {
    %c0_i32 = arith.constant 0 : i32
    %c0_i32_0 = arith.constant 0 : i32
    %c0_i32_1 = arith.constant 0 : i32
    return %c0_i32, %c0_i32_0 : i32, i32
  }
  func.func @transform_8(%arg0: i32) -> (i32, i32) {
    %c0_i32 = arith.constant 0 : i32
    %c0_i32_0 = arith.constant 0 : i32
    %c0_i32_1 = arith.constant 0 : i32
    return %c0_i32, %c0_i32_0 : i32, i32
  }
  func.func @transform_9(%arg0: i32) -> (i32, i32) {
    %c0_i32 = arith.constant 0 : i32
    %c0_i32_0 = arith.constant 0 : i32
    return %arg0, %c0_i32 : i32, i32
  }
}

</mosaic_0001>

<llo_original>
// kernel: dnn_forward.1
$region0: #{dnn_forward.1}
  #allocation0 [shape = 'u32[]', space=smem, size = 0x4, offset = 0x4, fixed_abs, tag = 'smem constant byte address 0x4 - core index']
  #allocation1 [shape = 'u32[144,128]{1,0:T(1,128)}', space=vmem, size = 0x12000, scoped, tag = 'internal scratch']
  %s0 = inlined_call_operand.vmem [shape: bf16[8,896], index: 0, kind: input, shape index: {}]
  %s1 = inlined_call_operand.vmem [shape: bf16[896,64], index: 1, kind: input, shape index: {}]
  %s2 = inlined_call_operand.vmem [shape: f32[1,64], index: 2, kind: input, shape index: {}]
  %s3 = inlined_call_operand.vmem [shape: bf16[64,64], index: 3, kind: input, shape index: {}]
  %s4 = inlined_call_operand.vmem [shape: f32[1,64], index: 4, kind: input, shape index: {}]
  %s5 = inlined_call_operand.vmem [shape: bf16[64,64], index: 5, kind: input, shape index: {}]
  %s6 = inlined_call_operand.vmem [shape: f32[1,64], index: 6, kind: input, shape index: {}]
  %s7 = inlined_call_operand.vmem [shape: bf16[64,128], index: 7, kind: input, shape index: {}]
  %s8 = inlined_call_operand.vmem [shape: f32[1,128], index: 8, kind: input, shape index: {}]
  %s9 = inlined_call_operand.hbm [shape: f32[8,128], index: 9, kind: output, shape index: {}]
  %s10 = sld [smem:[#allocation0]]
  $region46: #{dnn_forward.1} parent=0
    _
  %s12 = ssub.s32 1, %s10
  %s13 = scalar_select 0, %s12, %s10
  $region1: #{dnn_forward.1} parent=0
    #allocation2 [shape = 'u8[4096]{0}', space=vmem, size = 0x1000, scoped, tag = 'output window, operand 0, single buffered']
    #allocation3 [shape = 's32[1]{0}', space=sflag, size = 0x4, scoped, tag = 'scoped memory for dnn_forward.1']
    %14 = vsyncpa [#allocation3], 0
    // Predicated region
    $region2: #{dnn_forward.1} parent=1 // pred_check
      _
    $region3: #{dnn_forward.1} parent=1 // pred_check_branch
      %16 = sbr.rel (0) target = $region5
    $region4: #{dnn_forward.1} parent=1 // pred_region
      _
    $region5: #{dnn_forward.1} parent=1 // pred_fallthru
      _
    // Predicated region
    $region6: #{dnn_forward.1} parent=1 // pred_check
      _
    $region7: #{dnn_forward.1} parent=1 // pred_check_branch
      %18 = sbr.rel (0) target = $region9
    $region8: #{dnn_forward.1} parent=1 // pred_region
      _
    $region9: #{dnn_forward.1} parent=1 // pred_fallthru
      _
    // Predicated region
    $region10: #{dnn_forward.1} parent=1 // pred_check
      _
    $region11: #{dnn_forward.1} parent=1 // pred_check_branch
      %20 = sbr.rel (0) target = $region13
    $region12: #{dnn_forward.1} parent=1 // pred_region
      _
    $region13: #{dnn_forward.1} parent=1 // pred_fallthru
      _
    // Predicated region
    $region14: #{dnn_forward.1} parent=1 // pred_check
      _
    $region15: #{dnn_forward.1} parent=1 // pred_check_branch
      %22 = sbr.rel (0) target = $region17
    $region16: #{dnn_forward.1} parent=1 // pred_region
      _
    $region17: #{dnn_forward.1} parent=1 // pred_fallthru
      _
    // Predicated region
    $region18: #{dnn_forward.1} parent=1 // pred_check
      _
    $region19: #{dnn_forward.1} parent=1 // pred_check_branch
      %24 = sbr.rel (0) target = $region21
    $region20: #{dnn_forward.1} parent=1 // pred_region
      _
    $region21: #{dnn_forward.1} parent=1 // pred_fallthru
      _
    // Predicated region
    $region22: #{dnn_forward.1} parent=1 // pred_check
      _
    $region23: #{dnn_forward.1} parent=1 // pred_check_branch
      %26 = sbr.rel (0) target = $region25
    $region24: #{dnn_forward.1} parent=1 // pred_region
      _
    $region25: #{dnn_forward.1} parent=1 // pred_fallthru
      _
    // Predicated region
    $region26: #{dnn_forward.1} parent=1 // pred_check
      _
    $region27: #{dnn_forward.1} parent=1 // pred_check_branch
      %28 = sbr.rel (0) target = $region29
    $region28: #{dnn_forward.1} parent=1 // pred_region
      _
    $region29: #{dnn_forward.1} parent=1 // pred_fallthru
      _
    // Predicated region
    $region30: #{dnn_forward.1} parent=1 // pred_check
      _
    $region31: #{dnn_forward.1} parent=1 // pred_check_branch
      %30 = sbr.rel (0) target = $region33
    $region32: #{dnn_forward.1} parent=1 // pred_region
      _
    $region33: #{dnn_forward.1} parent=1 // pred_fallthru
      _
    // Predicated region
    $region34: #{dnn_forward.1} parent=1 // pred_check
      _
    $region35: #{dnn_forward.1} parent=1 // pred_check_branch
      %32 = sbr.rel (0) target = $region37
    $region36: #{dnn_forward.1} parent=1 // pred_region
      _
    $region37: #{dnn_forward.1} parent=1 // pred_fallthru
      _
    %v34 = vld [vmem:[%s0] sm:$0xff]
    %v35 = vld [vmem:[%s0 + $0x8] sm:$0xff]
    %v36 = vld [vmem:[%s0 + $0x10] sm:$0xff]
    %v37 = vld [vmem:[%s0 + $0x18] sm:$0xf]
    %v38 = vld [vmem:[%s1] sm:$0xf]
    %v39 = vld [vmem:[%s1 + $0x4] sm:$0xf]
    %v40 = vld [vmem:[%s1 + $0x8] sm:$0xf]
    %v41 = vld [vmem:[%s1 + $0xc] sm:$0xf]
    %v42 = vld [vmem:[%s1 + $0x10] sm:$0xf]
    %v43 = vld [vmem:[%s1 + $0x14] sm:$0xf]
    %v44 = vld [vmem:[%s1 + $0x18] sm:$0xf]
    %v45 = vld [vmem:[%s1 + $0x1c] sm:$0xf]
    %v46 = vld [vmem:[%s1 + $0x20] sm:$0xf]
    %v47 = vld [vmem:[%s1 + $0x24] sm:$0xf]
    %v48 = vld [vmem:[%s1 + $0x28] sm:$0xf]
    %v49 = vld [vmem:[%s1 + $0x2c] sm:$0xf]
    %v50 = vld [vmem:[%s1 + $0x30] sm:$0xf]
    %v51 = vld [vmem:[%s1 + $0x34] sm:$0xf]
    %v52 = vld [vmem:[%s1 + $0x38] sm:$0xf]
    %v53 = vld [vmem:[%s1 + $0x3c] sm:$0xf]
    %v54 = vld [vmem:[%s1 + $0x40] sm:$0xf]
    %v55 = vld [vmem:[%s1 + $0x44] sm:$0xf]
    %v56 = vld [vmem:[%s1 + $0x48] sm:$0xf]
    %v57 = vld [vmem:[%s1 + $0x4c] sm:$0xf]
    %v58 = vld [vmem:[%s1 + $0x50] sm:$0xf]
    %v59 = vld [vmem:[%s1 + $0x54] sm:$0xf]
    %v60 = vld [vmem:[%s1 + $0x58] sm:$0xf]
    %v61 = vld [vmem:[%s1 + $0x5c] sm:$0xf]
    %v62 = vld [vmem:[%s1 + $0x60] sm:$0xf]
    %v63 = vld [vmem:[%s1 + $0x64] sm:$0xf]
    %v64 = vld [vmem:[%s1 + $0x68] sm:$0xf]
    %v65 = vld [vmem:[%s1 + $0x6c] sm:$0xf]
    %v66 = vld [vmem:[%s1 + $0x70] sm:$0xf]
    %v67 = vld [vmem:[%s1 + $0x74] sm:$0xf]
    %v68 = vld [vmem:[%s1 + $0x78] sm:$0xf]
    %v69 = vld [vmem:[%s1 + $0x7c] sm:$0xf]
    %v70 = vld [vmem:[%s1 + $0x80] sm:$0xf]
    %v71 = vld [vmem:[%s1 + $0x84] sm:$0xf]
    %v72 = vld [vmem:[%s1 + $0x88] sm:$0xf]
    %v73 = vld [vmem:[%s1 + $0x8c] sm:$0xf]
    %v74 = vld [vmem:[%s1 + $0x90] sm:$0xf]
    %v75 = vld [vmem:[%s1 + $0x94] sm:$0xf]
    %v76 = vld [vmem:[%s1 + $0x98] sm:$0xf]
    %v77 = vld [vmem:[%s1 + $0x9c] sm:$0xf]
    %v78 = vld [vmem:[%s1 + $0xa0] sm:$0xf]
    %v79 = vld [vmem:[%s1 + $0xa4] sm:$0xf]
    %v80 = vld [vmem:[%s1 + $0xa8] sm:$0xf]
    %v81 = vld [vmem:[%s1 + $0xac] sm:$0xf]
    %v82 = vld [vmem:[%s1 + $0xb0] sm:$0xf]
    %v83 = vld [vmem:[%s1 + $0xb4] sm:$0xf]
    %v84 = vld [vmem:[%s1 + $0xb8] sm:$0xf]
    %v85 = vld [vmem:[%s1 + $0xbc] sm:$0xf]
    %v86 = vld [vmem:[%s1 + $0xc0] sm:$0xf]
    %v87 = vld [vmem:[%s1 + $0xc4] sm:$0xf]
    %v88 = vld [vmem:[%s1 + $0xc8] sm:$0xf]
    %v89 = vld [vmem:[%s1 + $0xcc] sm:$0xf]
    %v90 = vld [vmem:[%s1 + $0xd0] sm:$0xf]
    %v91 = vld [vmem:[%s1 + $0xd4] sm:$0xf]
    %v92 = vld [vmem:[%s1 + $0xd8] sm:$0xf]
    %v93 = vld [vmem:[%s1 + $0xdc] sm:$0xf]
    %v94 = vld [vmem:[%s1 + $0xe0] sm:$0xf]
    %v95 = vld [vmem:[%s1 + $0xe4] sm:$0xf]
    %v96 = vld [vmem:[%s1 + $0xe8] sm:$0xf]
    %v97 = vld [vmem:[%s1 + $0xec] sm:$0xf]
    %v98 = vld [vmem:[%s1 + $0xf0] sm:$0xf]
    %v99 = vld [vmem:[%s1 + $0xf4] sm:$0xf]
    %v100 = vld [vmem:[%s1 + $0xf8] sm:$0xf]
    %v101 = vld [vmem:[%s1 + $0xfc] sm:$0xf]
    %v102 = vld [vmem:[%s1 + $0x100] sm:$0xf]
    %v103 = vld [vmem:[%s1 + $0x104] sm:$0xf]
    %v104 = vld [vmem:[%s1 + $0x108] sm:$0xf]
    %v105 = vld [vmem:[%s1 + $0x10c] sm:$0xf]
    %v106 = vld [vmem:[%s1 + $0x110] sm:$0xf]
    %v107 = vld [vmem:[%s1 + $0x114] sm:$0xf]
    %v108 = vld [vmem:[%s1 + $0x118] sm:$0xf]
    %v109 = vld [vmem:[%s1 + $0x11c] sm:$0xf]
    %v110 = vld [vmem:[%s1 + $0x120] sm:$0xf]
    %v111 = vld [vmem:[%s1 + $0x124] sm:$0xf]
    %v112 = vld [vmem:[%s1 + $0x128] sm:$0xf]
    %v113 = vld [vmem:[%s1 + $0x12c] sm:$0xf]
    %v114 = vld [vmem:[%s1 + $0x130] sm:$0xf]
    %v115 = vld [vmem:[%s1 + $0x134] sm:$0xf]
    %v116 = vld [vmem:[%s1 + $0x138] sm:$0xf]
    %v117 = vld [vmem:[%s1 + $0x13c] sm:$0xf]
    %v118 = vld [vmem:[%s1 + $0x140] sm:$0xf]
    %v119 = vld [vmem:[%s1 + $0x144] sm:$0xf]
    %v120 = vld [vmem:[%s1 + $0x148] sm:$0xf]
    %v121 = vld [vmem:[%s1 + $0x14c] sm:$0xf]
    %v122 = vld [vmem:[%s1 + $0x150] sm:$0xf]
    %v123 = vld [vmem:[%s1 + $0x154] sm:$0xf]
    %v124 = vld [vmem:[%s1 + $0x158] sm:$0xf]
    %v125 = vld [vmem:[%s1 + $0x15c] sm:$0xf]
    %v126 = vld [vmem:[%s1 + $0x160] sm:$0xf]
    %v127 = vld [vmem:[%s1 + $0x164] sm:$0xf]
    %v128 = vld [vmem:[%s1 + $0x168] sm:$0xf]
    %v129 = vld [vmem:[%s1 + $0x16c] sm:$0xf]
    %v130 = vld [vmem:[%s1 + $0x170] sm:$0xf]
    %v131 = vld [vmem:[%s1 + $0x174] sm:$0xf]
    %v132 = vld [vmem:[%s1 + $0x178] sm:$0xf]
    %v133 = vld [vmem:[%s1 + $0x17c] sm:$0xf]
    %v134 = vld [vmem:[%s1 + $0x180] sm:$0xf]
    %v135 = vld [vmem:[%s1 + $0x184] sm:$0xf]
    %v136 = vld [vmem:[%s1 + $0x188] sm:$0xf]
    %v137 = vld [vmem:[%s1 + $0x18c] sm:$0xf]
    %v138 = vld [vmem:[%s1 + $0x190] sm:$0xf]
    %v139 = vld [vmem:[%s1 + $0x194] sm:$0xf]
    %v140 = vld [vmem:[%s1 + $0x198] sm:$0xf]
    %v141 = vld [vmem:[%s1 + $0x19c] sm:$0xf]
    %v142 = vld [vmem:[%s1 + $0x1a0] sm:$0xf]
    %v143 = vld [vmem:[%s1 + $0x1a4] sm:$0xf]
    %v144 = vld [vmem:[%s1 + $0x1a8] sm:$0xf]
    %v145 = vld [vmem:[%s1 + $0x1ac] sm:$0xf]
    %v146 = vld [vmem:[%s1 + $0x1b0] sm:$0xf]
    %v147 = vld [vmem:[%s1 + $0x1b4] sm:$0xf]
    %v148 = vld [vmem:[%s1 + $0x1b8] sm:$0xf]
    %v149 = vld [vmem:[%s1 + $0x1bc] sm:$0xf]
    %v150 = vld [vmem:[%s2] sm:$0x1]
    %v152 = vlaneseq
    %v153 = vshrl.u32 %v152, 7
    %v154 = vsub.s32 0, %v153
    %v155 = vrot.slane %v150, %v154
    %v161 = vunpack.c.l.b16 %v34
    %v162 = vunpack.c.h.b16 %v34
    %v163 = vunpack.c.l.b16 %v35
    %v164 = vunpack.c.h.b16 %v35
    %v165 = vunpack.c.l.b16 %v36
    %v166 = vunpack.c.h.b16 %v36
    %v167 = vunpack.c.l.b16 %v37
    %v168 = vpack.c.b16 %v161, %v161
    %v169 = vpack.c.b16 %v162, %v162
    %v170 = vpack.c.b16 %v163, %v163
    %v171 = vpack.c.b16 %v164, %v164
    %v172 = vpack.c.b16 %v165, %v165
    %v173 = vpack.c.b16 %v166, %v166
    %v174 = vpack.c.b16 %v167, %v167
    %v294 = vunpack.c.l.b16 %v38
    %v295 = vunpack.c.l.b16 %v39
    %v296 = vunpack.c.l.b16 %v40
    %v297 = vunpack.c.l.b16 %v41
    %v298 = vunpack.c.l.b16 %v42
    %v299 = vunpack.c.l.b16 %v43
    %v300 = vunpack.c.l.b16 %v44
    %v301 = vunpack.c.l.b16 %v45
    %v302 = vunpack.c.l.b16 %v46
    %v303 = vunpack.c.l.b16 %v47
    %v304 = vunpack.c.l.b16 %v48
    %v305 = vunpack.c.l.b16 %v49
    %v306 = vunpack.c.l.b16 %v50
    %v307 = vunpack.c.l.b16 %v51
    %v308 = vunpack.c.l.b16 %v52
    %v309 = vunpack.c.l.b16 %v53
    %v310 = vunpack.c.l.b16 %v54
    %v311 = vunpack.c.l.b16 %v55
    %v312 = vunpack.c.l.b16 %v56
    %v313 = vunpack.c.l.b16 %v57
    %v314 = vunpack.c.l.b16 %v58
    %v315 = vunpack.c.l.b16 %v59
    %v316 = vunpack.c.l.b16 %v60
    %v317 = vunpack.c.l.b16 %v61
    %v318 = vunpack.c.l.b16 %v62
    %v319 = vunpack.c.l.b16 %v63
    %v320 = vunpack.c.l.b16 %v64
    %v321 = vunpack.c.l.b16 %v65
    %v322 = vunpack.c.l.b16 %v66
    %v323 = vunpack.c.l.b16 %v67
    %v324 = vunpack.c.l.b16 %v68
    %v325 = vunpack.c.l.b16 %v69
    %v326 = vunpack.c.l.b16 %v70
    %v327 = vunpack.c.l.b16 %v71
    %v328 = vunpack.c.l.b16 %v72
    %v329 = vunpack.c.l.b16 %v73
    %v330 = vunpack.c.l.b16 %v74
    %v331 = vunpack.c.l.b16 %v75
    %v332 = vunpack.c.l.b16 %v76
    %v333 = vunpack.c.l.b16 %v77
    %v334 = vunpack.c.l.b16 %v78
    %v335 = vunpack.c.l.b16 %v79
    %v336 = vunpack.c.l.b16 %v80
    %v337 = vunpack.c.l.b16 %v81
    %v338 = vunpack.c.l.b16 %v82
    %v339 = vunpack.c.l.b16 %v83
    %v340 = vunpack.c.l.b16 %v84
    %v341 = vunpack.c.l.b16 %v85
    %v342 = vunpack.c.l.b16 %v86
    %v343 = vunpack.c.l.b16 %v87
    %v344 = vunpack.c.l.b16 %v88
    %v345 = vunpack.c.l.b16 %v89
    %v346 = vunpack.c.l.b16 %v90
    %v347 = vunpack.c.l.b16 %v91
    %v348 = vunpack.c.l.b16 %v92
    %v349 = vunpack.c.l.b16 %v93
    %v350 = vunpack.c.l.b16 %v94
    %v351 = vunpack.c.l.b16 %v95
    %v352 = vunpack.c.l.b16 %v96
    %v353 = vunpack.c.l.b16 %v97
    %v354 = vunpack.c.l.b16 %v98
    %v355 = vunpack.c.l.b16 %v99
    %v356 = vunpack.c.l.b16 %v100
    %v357 = vunpack.c.l.b16 %v101
    %v358 = vunpack.c.l.b16 %v102
    %v359 = vunpack.c.l.b16 %v103
    %v360 = vunpack.c.l.b16 %v104
    %v361 = vunpack.c.l.b16 %v105
    %v362 = vunpack.c.l.b16 %v106
    %v363 = vunpack.c.l.b16 %v107
    %v364 = vunpack.c.l.b16 %v108
    %v365 = vunpack.c.l.b16 %v109
    %v366 = vunpack.c.l.b16 %v110
    %v367 = vunpack.c.l.b16 %v111
    %v368 = vunpack.c.l.b16 %v112
    %v369 = vunpack.c.l.b16 %v113
    %v370 = vunpack.c.l.b16 %v114
    %v371 = vunpack.c.l.b16 %v115
    %v372 = vunpack.c.l.b16 %v116
    %v373 = vunpack.c.l.b16 %v117
    %v374 = vunpack.c.l.b16 %v118
    %v375 = vunpack.c.l.b16 %v119
    %v376 = vunpack.c.l.b16 %v120
    %v377 = vunpack.c.l.b16 %v121
    %v378 = vunpack.c.l.b16 %v122
    %v379 = vunpack.c.l.b16 %v123
    %v380 = vunpack.c.l.b16 %v124
    %v381 = vunpack.c.l.b16 %v125
    %v382 = vunpack.c.l.b16 %v126
    %v383 = vunpack.c.l.b16 %v127
    %v384 = vunpack.c.l.b16 %v128
    %v385 = vunpack.c.l.b16 %v129
    %v386 = vunpack.c.l.b16 %v130
    %v387 = vunpack.c.l.b16 %v131
    %v388 = vunpack.c.l.b16 %v132
    %v389 = vunpack.c.l.b16 %v133
    %v390 = vunpack.c.l.b16 %v134
    %v391 = vunpack.c.l.b16 %v135
    %v392 = vunpack.c.l.b16 %v136
    %v393 = vunpack.c.l.b16 %v137
    %v394 = vunpack.c.l.b16 %v138
    %v395 = vunpack.c.l.b16 %v139
    %v396 = vunpack.c.l.b16 %v140
    %v397 = vunpack.c.l.b16 %v141
    %v398 = vunpack.c.l.b16 %v142
    %v399 = vunpack.c.l.b16 %v143
    %v400 = vunpack.c.l.b16 %v144
    %v401 = vunpack.c.l.b16 %v145
    %v402 = vunpack.c.l.b16 %v146
    %v403 = vunpack.c.l.b16 %v147
    %v404 = vunpack.c.l.b16 %v148
    %v405 = vunpack.c.l.b16 %v149
    %v406 = vpack.c.b16 %v295, %v294
    %v407 = vpack.c.b16 %v297, %v296
    %v408 = vpack.c.b16 %v299, %v298
    %v409 = vpack.c.b16 %v301, %v300
    %v410 = vpack.c.b16 %v303, %v302
    %v411 = vpack.c.b16 %v305, %v304
    %v412 = vpack.c.b16 %v307, %v306
    %v413 = vpack.c.b16 %v309, %v308
    %v414 = vpack.c.b16 %v311, %v310
    %v415 = vpack.c.b16 %v313, %v312
    %v416 = vpack.c.b16 %v315, %v314
    %v417 = vpack.c.b16 %v317, %v316
    %v418 = vpack.c.b16 %v319, %v318
    %v419 = vpack.c.b16 %v321, %v320
    %v420 = vpack.c.b16 %v323, %v322
    %v421 = vpack.c.b16 %v325, %v324
    %v422 = vpack.c.b16 %v327, %v326
    %v423 = vpack.c.b16 %v329, %v328
    %v424 = vpack.c.b16 %v331, %v330
    %v425 = vpack.c.b16 %v333, %v332
    %v426 = vpack.c.b16 %v335, %v334
    %v427 = vpack.c.b16 %v337, %v336
    %v428 = vpack.c.b16 %v339, %v338
    %v429 = vpack.c.b16 %v341, %v340
    %v430 = vpack.c.b16 %v343, %v342
    %v431 = vpack.c.b16 %v345, %v344
    %v432 = vpack.c.b16 %v347, %v346
    %v433 = vpack.c.b16 %v349, %v348
    %v434 = vpack.c.b16 %v351, %v350
    %v435 = vpack.c.b16 %v353, %v352
    %v436 = vpack.c.b16 %v355, %v354
    %v437 = vpack.c.b16 %v357, %v356
    %v438 = vpack.c.b16 %v359, %v358
    %v439 = vpack.c.b16 %v361, %v360
    %v440 = vpack.c.b16 %v363, %v362
    %v441 = vpack.c.b16 %v365, %v364
    %v442 = vpack.c.b16 %v367, %v366
    %v443 = vpack.c.b16 %v369, %v368
    %v444 = vpack.c.b16 %v371, %v370
    %v445 = vpack.c.b16 %v373, %v372
    %v446 = vpack.c.b16 %v375, %v374
    %v447 = vpack.c.b16 %v377, %v376
    %v448 = vpack.c.b16 %v379, %v378
    %v449 = vpack.c.b16 %v381, %v380
    %v450 = vpack.c.b16 %v383, %v382
    %v451 = vpack.c.b16 %v385, %v384
    %v452 = vpack.c.b16 %v387, %v386
    %v453 = vpack.c.b16 %v389, %v388
    %v454 = vpack.c.b16 %v391, %v390
    %v455 = vpack.c.b16 %v393, %v392
    %v456 = vpack.c.b16 %v395, %v394
    %v457 = vpack.c.b16 %v397, %v396
    %v458 = vpack.c.b16 %v399, %v398
    %v459 = vpack.c.b16 %v401, %v400
    %v460 = vpack.c.b16 %v403, %v402
    %v461 = vpack.c.b16 %v405, %v404
    %518 = vmatprep.subr.bf16.mxu0 0
    %519 = vmatpush1.bf16.msra.mxu0 %v413
    %520 = vmatprep.subr.bf16.mxu0 0
    %521 = vmatpush1.bf16.msra.mxu0 %v412
    %522 = vmatprep.subr.bf16.mxu0 0
    %523 = vmatpush1.bf16.msra.mxu0 %v411
    %524 = vmatprep.subr.bf16.mxu0 0
    %525 = vmatpush1.bf16.msra.mxu0 %v410
    %526 = vmatprep.subr.bf16.mxu0 0
    %527 = vmatpush1.bf16.msra.mxu0 %v409
    %528 = vmatprep.subr.bf16.mxu0 0
    %529 = vmatpush1.bf16.msra.mxu0 %v408
    %530 = vmatprep.subr.bf16.mxu0 0
    %531 = vmatpush1.bf16.msra.mxu0 %v407
    %532 = vmatprep.subr.bf16.mxu0 0
    %533 = vmatpush1.bf16.msra.mxu0 %v406
    %534 = vmatprep.subr.bf16.mxu0 0
    %535 = vmatpush2.bf16.msra.mxu0 %v421
    %536 = vmatprep.subr.bf16.mxu0 0
    %537 = vmatpush2.bf16.msra.mxu0 %v420
    %538 = vmatprep.subr.bf16.mxu0 0
    %539 = vmatpush2.bf16.msra.mxu0 %v419
    %540 = vmatprep.subr.bf16.mxu0 0
    %541 = vmatpush2.bf16.msra.mxu0 %v418
    %542 = vmatprep.subr.bf16.mxu0 0
    %543 = vmatpush2.bf16.msra.mxu0 %v417
    %544 = vmatprep.subr.bf16.mxu0 0
    %545 = vmatpush2.bf16.msra.mxu0 %v416
    %546 = vmatprep.subr.bf16.mxu0 0
    %547 = vmatpush2.bf16.msra.mxu0 %v415
    %548 = vmatprep.subr.bf16.mxu0 0
    %549 = vmatpush2.bf16.msra.mxu0 %v414
    %550 = vmatprep.mubr.bf16.mxu0 %v169
    %551 = vmatmul.mubr.bf16.gmra.mxu0 %v168
    %v552 = vpop.f32.mrf.mxu0
    %v553 = vadd.f32 %v155, %v552
    %v554 = vpop.f32.mrf.mxu0
    %v555 = vpop.f32.mrf.mxu0
    %v556 = vpop.f32.mrf.mxu0
    %557 = vdwg.mxu0
    %558 = vmatprep.subr.bf16.mxu0 0
    %559 = vmatpush1.bf16.msra.mxu0 %v429
    %560 = vmatprep.subr.bf16.mxu0 0
    %561 = vmatpush1.bf16.msra.mxu0 %v428
    %562 = vmatprep.subr.bf16.mxu0 0
    %563 = vmatpush1.bf16.msra.mxu0 %v427
    %564 = vmatprep.subr.bf16.mxu0 0
    %565 = vmatpush1.bf16.msra.mxu0 %v426
    %566 = vmatprep.subr.bf16.mxu0 0
    %567 = vmatpush1.bf16.msra.mxu0 %v425
    %568 = vmatprep.subr.bf16.mxu0 0
    %569 = vmatpush1.bf16.msra.mxu0 %v424
    %570 = vmatprep.subr.bf16.mxu0 0
    %571 = vmatpush1.bf16.msra.mxu0 %v423
    %572 = vmatprep.subr.bf16.mxu0 0
    %573 = vmatpush1.bf16.msra.mxu0 %v422
    %574 = vmatprep.subr.bf16.mxu0 0
    %575 = vmatpush2.bf16.msra.mxu0 %v437
    %576 = vmatprep.subr.bf16.mxu0 0
    %577 = vmatpush2.bf16.msra.mxu0 %v436
    %578 = vmatprep.subr.bf16.mxu0 0
    %579 = vmatpush2.bf16.msra.mxu0 %v435
    %580 = vmatprep.subr.bf16.mxu0 0
    %581 = vmatpush2.bf16.msra.mxu0 %v434
    %582 = vmatprep.subr.bf16.mxu0 0
    %583 = vmatpush2.bf16.msra.mxu0 %v433
    %584 = vmatprep.subr.bf16.mxu0 0
    %585 = vmatpush2.bf16.msra.mxu0 %v432
    %586 = vmatprep.subr.bf16.mxu0 0
    %587 = vmatpush2.bf16.msra.mxu0 %v431
    %588 = vmatprep.subr.bf16.mxu0 0
    %589 = vmatpush2.bf16.msra.mxu0 %v430
    %590 = vmatprep.mubr.bf16.mxu0 %v171
    %591 = vmatmul.mubr.bf16.gmra.mxu0 %v170
    %v592 = vpop.f32.mrf.mxu0
    %v593 = vadd.f32 %v553, %v592
    %v594 = vpop.f32.mrf.mxu0
    %v595 = vpop.f32.mrf.mxu0
    %v596 = vpop.f32.mrf.mxu0
    %597 = vdwg.mxu0
    %598 = vmatprep.subr.bf16.mxu0 0
    %599 = vmatpush1.bf16.msra.mxu0 %v445
    %600 = vmatprep.subr.bf16.mxu0 0
    %601 = vmatpush1.bf16.msra.mxu0 %v444
    %602 = vmatprep.subr.bf16.mxu0 0
    %603 = vmatpush1.bf16.msra.mxu0 %v443
    %604 = vmatprep.subr.bf16.mxu0 0
    %605 = vmatpush1.bf16.msra.mxu0 %v442
    %606 = vmatprep.subr.bf16.mxu0 0
    %607 = vmatpush1.bf16.msra.mxu0 %v441
    %608 = vmatprep.subr.bf16.mxu0 0
    %609 = vmatpush1.bf16.msra.mxu0 %v440
    %610 = vmatprep.subr.bf16.mxu0 0
    %611 = vmatpush1.bf16.msra.mxu0 %v439
    %612 = vmatprep.subr.bf16.mxu0 0
    %613 = vmatpush1.bf16.msra.mxu0 %v438
    %614 = vmatprep.subr.bf16.mxu0 0
    %615 = vmatpush2.bf16.msra.mxu0 %v453
    %616 = vmatprep.subr.bf16.mxu0 0
    %617 = vmatpush2.bf16.msra.mxu0 %v452
    %618 = vmatprep.subr.bf16.mxu0 0
    %619 = vmatpush2.bf16.msra.mxu0 %v451
    %620 = vmatprep.subr.bf16.mxu0 0
    %621 = vmatpush2.bf16.msra.mxu0 %v450
    %622 = vmatprep.subr.bf16.mxu0 0
    %623 = vmatpush2.bf16.msra.mxu0 %v449
    %624 = vmatprep.subr.bf16.mxu0 0
    %625 = vmatpush2.bf16.msra.mxu0 %v448
    %626 = vmatprep.subr.bf16.mxu0 0
    %627 = vmatpush2.bf16.msra.mxu0 %v447
    %628 = vmatprep.subr.bf16.mxu0 0
    %629 = vmatpush2.bf16.msra.mxu0 %v446
    %630 = vmatprep.mubr.bf16.mxu0 %v173
    %631 = vmatmul.mubr.bf16.gmra.mxu0 %v172
    %v632 = vpop.f32.mrf.mxu0
    %v633 = vadd.f32 %v593, %v632
    %v634 = vpop.f32.mrf.mxu0
    %v635 = vpop.f32.mrf.mxu0
    %v636 = vpop.f32.mrf.mxu0
    %637 = vdwg.mxu0
    %638 = vmatprep.subr.bf16.mxu0 0
    %639 = vmatpush1.bf16.msra.mxu0 %v461
    %640 = vmatprep.subr.bf16.mxu0 0
    %641 = vmatpush1.bf16.msra.mxu0 %v460
    %642 = vmatprep.subr.bf16.mxu0 0
    %643 = vmatpush1.bf16.msra.mxu0 %v459
    %644 = vmatprep.subr.bf16.mxu0 0
    %645 = vmatpush1.bf16.msra.mxu0 %v458
    %646 = vmatprep.subr.bf16.mxu0 0
    %647 = vmatpush1.bf16.msra.mxu0 %v457
    %648 = vmatprep.subr.bf16.mxu0 0
    %649 = vmatpush1.bf16.msra.mxu0 %v456
    %650 = vmatprep.subr.bf16.mxu0 0
    %651 = vmatpush1.bf16.msra.mxu0 %v455
    %652 = vmatprep.subr.bf16.mxu0 0
    %653 = vmatpush1.bf16.msra.mxu0 %v454
    %654 = vmatprep.subr.bf16.mxu0 0
    %655 = vmatpush2.bf16.msra.mxu0 0
    %656 = vmatprep.subr.bf16.mxu0 0
    %657 = vmatpush2.bf16.msra.mxu0 0
    %658 = vmatprep.subr.bf16.mxu0 0
    %659 = vmatpush2.bf16.msra.mxu0 0
    %660 = vmatprep.subr.bf16.mxu0 0
    %661 = vmatpush2.bf16.msra.mxu0 0
    %662 = vmatprep.subr.bf16.mxu0 0
    %663 = vmatpush2.bf16.msra.mxu0 0
    %664 = vmatprep.subr.bf16.mxu0 0
    %665 = vmatpush2.bf16.msra.mxu0 0
    %666 = vmatprep.subr.bf16.mxu0 0
    %667 = vmatpush2.bf16.msra.mxu0 0
    %668 = vmatprep.subr.bf16.mxu0 0
    %669 = vmatpush2.bf16.msra.mxu0 0
    %670 = vmatprep.mubr.bf16.mxu0 0
    %671 = vmatmul.mubr.bf16.gmra.mxu0 %v174
    %v672 = vpop.f32.mrf.mxu0
    %v673 = vadd.f32 %v633, %v672
    %v674 = vpop.f32.mrf.mxu0
    %v675 = vpop.f32.mrf.mxu0
    %v676 = vpop.f32.mrf.mxu0
    %677 = vdwg.mxu0
    %v678 = vmax.f32 %v673, 0.0
    %v679 = vpack.c.bf16 %v678, %v678
    %v680 = vld [vmem:[%s3] sm:$0xf]
    %v681 = vld [vmem:[%s3 + $0x4] sm:$0xf]
    %v682 = vld [vmem:[%s3 + $0x8] sm:$0xf]
    %v683 = vld [vmem:[%s3 + $0xc] sm:$0xf]
    %v684 = vld [vmem:[%s3 + $0x10] sm:$0xf]
    %v685 = vld [vmem:[%s3 + $0x14] sm:$0xf]
    %v686 = vld [vmem:[%s3 + $0x18] sm:$0xf]
    %v687 = vld [vmem:[%s3 + $0x1c] sm:$0xf]
    %v688 = vld [vmem:[%s4] sm:$0x1]
    %v690 = vlaneseq
    %v691 = vshrl.u32 %v690, 7
    %v692 = vsub.s32 0, %v691
    %v693 = vrot.slane %v688, %v692
    %v703 = vunpack.c.l.b16 %v680
    %v704 = vunpack.c.l.b16 %v681
    %v705 = vunpack.c.l.b16 %v682
    %v706 = vunpack.c.l.b16 %v683
    %v707 = vunpack.c.l.b16 %v684
    %v708 = vunpack.c.l.b16 %v685
    %v709 = vunpack.c.l.b16 %v686
    %v710 = vunpack.c.l.b16 %v687
    %v711 = vpack.c.b16 %v704, %v703
    %v712 = vpack.c.b16 %v706, %v705
    %v713 = vpack.c.b16 %v708, %v707
    %v714 = vpack.c.b16 %v710, %v709
    %vm719 = vcmask 523264
    %v721 = vsel %vm719, %v679, 0
    %723 = vmatprep.subr.bf16.mxu0 0
    %724 = vmatpush1.bf16.msra.mxu0 0
    %725 = vmatprep.subr.bf16.mxu0 0
    %726 = vmatpush1.bf16.msra.mxu0 0
    %727 = vmatprep.subr.bf16.mxu0 0
    %728 = vmatpush1.bf16.msra.mxu0 0
    %729 = vmatprep.subr.bf16.mxu0 0
    %730 = vmatpush1.bf16.msra.mxu0 0
    %731 = vmatprep.subr.bf16.mxu0 0
    %732 = vmatpush1.bf16.msra.mxu0 %v714
    %733 = vmatprep.subr.bf16.mxu0 0
    %734 = vmatpush1.bf16.msra.mxu0 %v713
    %735 = vmatprep.subr.bf16.mxu0 0
    %736 = vmatpush1.bf16.msra.mxu0 %v712
    %737 = vmatprep.subr.bf16.mxu0 0
    %738 = vmatpush1.bf16.msra.mxu0 %v711
    %739 = vmatprep.subr.bf16.mxu0 0
    %740 = vmatpush2.bf16.msra.mxu0 0
    %741 = vmatprep.subr.bf16.mxu0 0
    %742 = vmatpush2.bf16.msra.mxu0 0
    %743 = vmatprep.subr.bf16.mxu0 0
    %744 = vmatpush2.bf16.msra.mxu0 0
    %745 = vmatprep.subr.bf16.mxu0 0
    %746 = vmatpush2.bf16.msra.mxu0 0
    %747 = vmatprep.subr.bf16.mxu0 0
    %748 = vmatpush2.bf16.msra.mxu0 0
    %749 = vmatprep.subr.bf16.mxu0 0
    %750 = vmatpush2.bf16.msra.mxu0 0
    %751 = vmatprep.subr.bf16.mxu0 0
    %752 = vmatpush2.bf16.msra.mxu0 0
    %753 = vmatprep.subr.bf16.mxu0 0
    %754 = vmatpush2.bf16.msra.mxu0 0
    %755 = vmatprep.mubr.bf16.mxu0 0
    %756 = vmatmul.mubr.bf16.gmra.mxu0 %v721
    %v757 = vpop.f32.mrf.mxu0
    %v758 = vadd.f32 %v693, %v757
    %v759 = vpop.f32.mrf.mxu0
    %v760 = vpop.f32.mrf.mxu0
    %v761 = vpop.f32.mrf.mxu0
    %762 = vdwg.mxu0
    %v763 = vmax.f32 %v758, 0.0
    %v764 = vpack.c.bf16 %v763, %v763
    %v765 = vld [vmem:[%s5] sm:$0xf]
    %v766 = vld [vmem:[%s5 + $0x4] sm:$0xf]
    %v767 = vld [vmem:[%s5 + $0x8] sm:$0xf]
    %v768 = vld [vmem:[%s5 + $0xc] sm:$0xf]
    %v769 = vld [vmem:[%s5 + $0x10] sm:$0xf]
    %v770 = vld [vmem:[%s5 + $0x14] sm:$0xf]
    %v771 = vld [vmem:[%s5 + $0x18] sm:$0xf]
    %v772 = vld [vmem:[%s5 + $0x1c] sm:$0xf]
    %v773 = vld [vmem:[%s6] sm:$0x1]
    %v775 = vlaneseq
    %v776 = vshrl.u32 %v775, 7
    %v777 = vsub.s32 0, %v776
    %v778 = vrot.slane %v773, %v777
    %v788 = vunpack.c.l.b16 %v765
    %v789 = vunpack.c.l.b16 %v766
    %v790 = vunpack.c.l.b16 %v767
    %v791 = vunpack.c.l.b16 %v768
    %v792 = vunpack.c.l.b16 %v769
    %v793 = vunpack.c.l.b16 %v770
    %v794 = vunpack.c.l.b16 %v771
    %v795 = vunpack.c.l.b16 %v772
    %v796 = vpack.c.b16 %v789, %v788
    %v797 = vpack.c.b16 %v791, %v790
    %v798 = vpack.c.b16 %v793, %v792
    %v799 = vpack.c.b16 %v795, %v794
    %v805 = vsel %vm719, %v764, 0
    %807 = vmatprep.subr.bf16.mxu0 0
    %808 = vmatpush1.bf16.msra.mxu0 0
    %809 = vmatprep.subr.bf16.mxu0 0
    %810 = vmatpush1.bf16.msra.mxu0 0
    %811 = vmatprep.subr.bf16.mxu0 0
    %812 = vmatpush1.bf16.msra.mxu0 0
    %813 = vmatprep.subr.bf16.mxu0 0
    %814 = vmatpush1.bf16.msra.mxu0 0
    %815 = vmatprep.subr.bf16.mxu0 0
    %816 = vmatpush1.bf16.msra.mxu0 %v799
    %817 = vmatprep.subr.bf16.mxu0 0
    %818 = vmatpush1.bf16.msra.mxu0 %v798
    %819 = vmatprep.subr.bf16.mxu0 0
    %820 = vmatpush1.bf16.msra.mxu0 %v797
    %821 = vmatprep.subr.bf16.mxu0 0
    %822 = vmatpush1.bf16.msra.mxu0 %v796
    %823 = vmatprep.subr.bf16.mxu0 0
    %824 = vmatpush2.bf16.msra.mxu0 0
    %825 = vmatprep.subr.bf16.mxu0 0
    %826 = vmatpush2.bf16.msra.mxu0 0
    %827 = vmatprep.subr.bf16.mxu0 0
    %828 = vmatpush2.bf16.msra.mxu0 0
    %829 = vmatprep.subr.bf16.mxu0 0
    %830 = vmatpush2.bf16.msra.mxu0 0
    %831 = vmatprep.subr.bf16.mxu0 0
    %832 = vmatpush2.bf16.msra.mxu0 0
    %833 = vmatprep.subr.bf16.mxu0 0
    %834 = vmatpush2.bf16.msra.mxu0 0
    %835 = vmatprep.subr.bf16.mxu0 0
    %836 = vmatpush2.bf16.msra.mxu0 0
    %837 = vmatprep.subr.bf16.mxu0 0
    %838 = vmatpush2.bf16.msra.mxu0 0
    %839 = vmatprep.mubr.bf16.mxu0 0
    %840 = vmatmul.mubr.bf16.gmra.mxu0 %v805
    %v841 = vpop.f32.mrf.mxu0
    %v842 = vadd.f32 %v778, %v841
    %v843 = vpop.f32.mrf.mxu0
    %v844 = vpop.f32.mrf.mxu0
    %v845 = vpop.f32.mrf.mxu0
    %846 = vdwg.mxu0
    %v847 = vmax.f32 %v842, 0.0
    %v848 = vpack.c.bf16 %v847, %v847
    %v849 = vld [vmem:[%s7] sm:$0xf]
    %v850 = vld [vmem:[%s7 + $0x4] sm:$0xf]
    %v851 = vld [vmem:[%s7 + $0x8] sm:$0xf]
    %v852 = vld [vmem:[%s7 + $0xc] sm:$0xf]
    %v853 = vld [vmem:[%s7 + $0x10] sm:$0xf]
    %v854 = vld [vmem:[%s7 + $0x14] sm:$0xf]
    %v855 = vld [vmem:[%s7 + $0x18] sm:$0xf]
    %v856 = vld [vmem:[%s7 + $0x1c] sm:$0xf]
    %v857 = vld [vmem:[%s8] sm:$0x1]
    %v859 = vlaneseq
    %v860 = vshrl.u32 %v859, 7
    %v861 = vsub.s32 0, %v860
    %v862 = vrot.slane %v857, %v861
    %v872 = vunpack.c.l.b16 %v849
    %v873 = vunpack.c.l.b16 %v850
    %v874 = vunpack.c.l.b16 %v851
    %v875 = vunpack.c.l.b16 %v852
    %v876 = vunpack.c.l.b16 %v853
    %v877 = vunpack.c.l.b16 %v854
    %v878 = vunpack.c.l.b16 %v855
    %v879 = vunpack.c.l.b16 %v856
    %v880 = vpack.c.b16 %v873, %v872
    %v881 = vpack.c.b16 %v875, %v874
    %v882 = vpack.c.b16 %v877, %v876
    %v883 = vpack.c.b16 %v879, %v878
    %v889 = vsel %vm719, %v848, 0
    %891 = vmatprep.subr.bf16.mxu0 0
    %892 = vmatpush1.bf16.msra.mxu0 0
    %893 = vmatprep.subr.bf16.mxu0 0
    %894 = vmatpush1.bf16.msra.mxu0 0
    %895 = vmatprep.subr.bf16.mxu0 0
    %896 = vmatpush1.bf16.msra.mxu0 0
    %897 = vmatprep.subr.bf16.mxu0 0
    %898 = vmatpush1.bf16.msra.mxu0 0
    %899 = vmatprep.subr.bf16.mxu0 0
    %900 = vmatpush1.bf16.msra.mxu0 %v883
    %901 = vmatprep.subr.bf16.mxu0 0
    %902 = vmatpush1.bf16.msra.mxu0 %v882
    %903 = vmatprep.subr.bf16.mxu0 0
    %904 = vmatpush1.bf16.msra.mxu0 %v881
    %905 = vmatprep.subr.bf16.mxu0 0
    %906 = vmatpush1.bf16.msra.mxu0 %v880
    %907 = vmatprep.subr.bf16.mxu0 0
    %908 = vmatpush2.bf16.msra.mxu0 0
    %909 = vmatprep.subr.bf16.mxu0 0
    %910 = vmatpush2.bf16.msra.mxu0 0
    %911 = vmatprep.subr.bf16.mxu0 0
    %912 = vmatpush2.bf16.msra.mxu0 0
    %913 = vmatprep.subr.bf16.mxu0 0
    %914 = vmatpush2.bf16.msra.mxu0 0
    %915 = vmatprep.subr.bf16.mxu0 0
    %916 = vmatpush2.bf16.msra.mxu0 0
    %917 = vmatprep.subr.bf16.mxu0 0
    %918 = vmatpush2.bf16.msra.mxu0 0
    %919 = vmatprep.subr.bf16.mxu0 0
    %920 = vmatpush2.bf16.msra.mxu0 0
    %921 = vmatprep.subr.bf16.mxu0 0
    %922 = vmatpush2.bf16.msra.mxu0 0
    %923 = vmatprep.mubr.bf16.mxu0 0
    %924 = vmatmul.mubr.bf16.gmra.mxu0 %v889
    %v925 = vpop.f32.mrf.mxu0
    %v926 = vadd.f32 %v862, %v925
    %v927 = vpop.f32.mrf.mxu0
    %v928 = vpop.f32.mrf.mxu0
    %v929 = vpop.f32.mrf.mxu0
    %930 = vdwg.mxu0
    %931 = vmax.xlane.f32.xlu0 %v926
    %v932 = vpop.xlane.xlu0 %931
    %v933 = vsub.f32 %v926, %v932
    %v934 = vmul.f32 %v933, 1.442695
    %v935 = vpow.pop %v934
    %936 = vadd.xlane.f32.xlu0 %v935
    %v937 = vpop.xlane.xlu0 %936
    %v938 = vlog2.pop %v937
    %v939 = vmul.f32 %v938, 0.6931472
    %v940 = vadd.f32 %v939, %v932
    %v941 = vsub.f32 %v926, %v940
    %942 = vst [vmem:[#allocation2] sm:$0xff] %v941
    // Predicated region
    $region38: #{dnn_forward.1} parent=1 // pred_check
      _
    $region39: #{dnn_forward.1} parent=1 // pred_check_branch
      %944 = sbr.rel (0) target = $region41
    $region40: #{dnn_forward.1} parent=1 // pred_region
      %s946 = ssub.s32 128, 128
      %947 = vsyncadd [#allocation3], %s946
      %s949 = sshll.u32 [#allocation2], 4
      %s950 = int_to_ptr.vmem [resolvable:$true] %s949
      %952 = dma.vmem_to_hbm [thread:$0]  %s950, 128, %s9, [#allocation3]
    $region41: #{dnn_forward.1} parent=1 // pred_fallthru
      _
    // Predicated region
    $region42: #{dnn_forward.1} parent=1 // pred_check
      _
    $region43: #{dnn_forward.1} parent=1 // pred_check_branch
      %954 = sbr.rel (0) target = $region45
    $region44: #{dnn_forward.1} parent=1 // pred_region
      %955 = dma.done [#allocation3], 128
    $region45: #{dnn_forward.1} parent=1 // pred_fallthru
      _
    %956 = vsyncpa [#allocation3], 1

</llo_original>
